<compile_context>
chip_gen: v7x
topology: tpu7x:2x2x1
jax: 0.10.0
libtpu: 0.0.40
codegen_flags: <defaults>
</compile_context>

<pallas_src>
import functools

import jax
import jax.numpy as jnp
from jax.experimental import pallas as pl
from jax.experimental.pallas import tpu as pltpu

KERNEL_SIZE = 3  # Conv1d kernel size (stride=1, padding=1)


def _cnn_pooler_kernel(x_ref, w_ref, b_ref, o_ref, *, tb, seq_len):
    # x_ref : [TB*L, H]   TB batch elements, seq-flattened (unshifted LHS)
    # w_ref : [K, H, C]   conv weight, tap-major, transposed for matmul
    # b_ref : [1, C]      conv bias
    # o_ref : [TB, C]     pooled output block
    L = seq_len
    R = tb * L
    C = o_ref.shape[1]

    x = x_ref[...]  # one load; the same LHS feeds all three tap matmuls
    y0 = jnp.dot(x, w_ref[0], preferred_element_type=jnp.float32)  # left-neighbour tap
    y1 = jnp.dot(x, w_ref[1], preferred_element_type=jnp.float32)  # centre tap
    y2 = jnp.dot(x, w_ref[2], preferred_element_type=jnp.float32)  # right-neighbour tap

    # conv[r] = y0[r-1] + y1[r] + y2[r+1]; zero the terms that would roll
    # across a batch boundary (conv zero-padding at seq position 0 / L-1).
    pos = jax.lax.broadcasted_iota(jnp.int32, (R, C), 0) % L
    y0s = jnp.where(pos != 0, pltpu.roll(y0, shift=1, axis=0), 0.0)
    y2s = jnp.where(pos != L - 1, pltpu.roll(y2, shift=R - 1, axis=0), 0.0)
    conv = y0s + y1 + y2s                                           # [R, C] f32

    # Max over seq first, then bias + ReLU (exact hoist), single dense store.
    pooled = jnp.max(conv.reshape(tb, L, C), axis=1)                # [TB, C]
    bias = b_ref[...].astype(jnp.float32)                           # [1, C]
    o_ref[...] = jnp.maximum(pooled + bias, 0.0).astype(o_ref.dtype)


def _vmem_budget_bytes():
    """Scoped-VMEM budget, derived from the chip (v5e/v6e: 128 MiB, v7x: 64 MiB)."""
    try:
        cap = pltpu.get_tpu_info().vmem_capacity_bytes
    except Exception:
        cap = 64 << 20                      # conservative fallback (v7x per-TC)
    return int(min(cap * 3 // 4, 96 << 20))  # leave headroom for compiler scratch


def _choose_batch_tile(batch, seq_len, hidden, out_ch, x_itemsize, vmem_budget):
    """Batch elements per grid step, sized from the VMEM budget (not a fixed 256)."""
    lane = 128
    h_pad = -(-hidden // lane) * lane
    c_pad = -(-out_ch // lane) * lane
    # Per matmul-row VMEM bytes: double-buffered x tile + ~6 live f32 [rows, C]
    # intermediates (3 taps, 2 rolled/masked copies, conv sum), lane-padded.
    per_row = 2 * h_pad * x_itemsize + 6 * c_pad * 4
    rows = max(vmem_budget // (2 * per_row), 8)     # use <= ~half the budget
    tb = max(rows // max(seq_len, 1), 1)
    if tb >= batch:
        return batch, 1            # single step: block shapes == full array dims
    tb = max((tb // 8) * 8, 8)     # multi-step: TB (and TB*L) multiples of 8
    return tb, -(-batch // tb)


def cnn_pooler(x, weight, bias, *, compute_dtype=None):
    """x: [B, L, H]; weight: [C, H, K] (PyTorch Conv1d layout); bias: [C] -> [B, C]."""
    B, L, H = x.shape
    C, H_w, K = weight.shape
    assert H_w == H and K == KERNEL_SIZE
    out_dtype = x.dtype

    if compute_dtype is not None:        # e.g. jnp.bfloat16: halves HBM bytes
        x = x.astype(compute_dtype)
        weight = weight.astype(compute_dtype)

    vmem_budget = _vmem_budget_bytes()
    TB, n_steps = _choose_batch_tile(B, L, H, C, jnp.dtype(x.dtype).itemsize,
                                     vmem_budget)
    BP = n_steps * TB
    if BP != B:
        # Ragged tail (rare): pad batch so the grid tiles evenly.
        # TODO(synk): replace with an in-kernel tail mask to avoid this extra HBM pass.
        x = jnp.pad(x, ((0, BP - B), (0, 0), (0, 0)))

    x_flat = x.reshape(BP * L, H)                 # free reshape: no extra HBM pass
    w_khc = jnp.transpose(weight, (2, 1, 0))      # [K, H, C]: each tap is an [H, C] RHS
    b_1c = bias.reshape(1, C)

    kernel = functools.partial(_cnn_pooler_kernel, tb=TB, seq_len=L)

    out = pl.pallas_call(
        kernel,
        out_shape=jax.ShapeDtypeStruct((BP, C), out_dtype),
        grid_spec=pltpu.PrefetchScalarGridSpec(
            num_scalar_prefetch=0,
            grid=(n_steps,),
            in_specs=[
                pl.BlockSpec((TB * L, H), lambda i: (i, 0)),
                pl.BlockSpec((K, H, C), lambda i: (0, 0, 0)),
                pl.BlockSpec((1, C), lambda i: (0, 0)),
            ],
            out_specs=pl.BlockSpec((TB, C), lambda i: (i, 0)),
        ),
        compiler_params=pltpu.CompilerParams(
            dimension_semantics=("parallel",),
            vmem_limit_bytes=vmem_budget),
    )(x_flat, w_khc, b_1c)

    return out[:B] if BP != B else out


def _reference(x, weight, bias):
    """Pure-JAX reference matching PyTorch semantics (x: [B, L, H])."""
    B, L, H = x.shape
    x_pad = jnp.pad(x, ((0, 0), (1, 1), (0, 0)))
    out = jnp.zeros((B, L, weight.shape[0]), jnp.float32)
    for k in range(KERNEL_SIZE):
        out = out + jnp.einsum('blh,ch->blc', x_pad[:, k:k + L, :], weight[:, :, k])
    out = jnp.maximum(out + bias[None, None, :], 0.0)
    return jnp.max(out, axis=1)


if __name__ == "__main__":
    # Small shapes consistent with the module: hidden=32 in, 16 out channels,
    # batch=2, seq=8.
    B, L, H, C = 2, 8, 32, 16

    key = jax.random.PRNGKey(0)
    kx, kw, kb = jax.random.split(key, 3)
    x = jax.random.normal(kx, (B, L, H), dtype=jnp.float32)
    weight = jax.random.normal(kw, (C, H, KERNEL_SIZE), dtype=jnp.float32) * 0.05
    bias = jax.random.normal(kb, (C,), dtype=jnp.float32) * 0.05

    out = jax.block_until_ready(cnn_pooler(x, weight, bias))
    ref = _reference(x, weight, bias)
    assert out.shape == (B, C), out.shape
    assert jnp.allclose(out, ref, atol=1e-5, rtol=1e-5), "mismatch vs reference"
    print("KERNEL_OK")
</pallas_src>

<mosaic_0001>
module attributes {stable_mosaic.version = 11 : i64} {
  func.func @_cnn_pooler_kernel(%arg0: i32, %arg1: memref<16x32xf32, #tpu.memory_space<vmem>>, %arg2: memref<3x32x16xf32, #tpu.memory_space<vmem>>, %arg3: memref<1x16xf32, #tpu.memory_space<vmem>>, %arg4: memref<2x16xf32, #tpu.memory_space<vmem>>) attributes {dimension_semantics = [#tpu.dimension_semantics<parallel>], iteration_bounds = array<i64: 1>, scalar_prefetch = 0 : i64, scratch_operands = 0 : i64, tpu.core_type = #tpu.core_type<tc>, window_params = [{transform_indices = @transform_0, window_bounds = array<i64: 16, 32>}, {pipeline_mode = #tpu.pipeline_mode<synchronous>, transform_indices = @transform_1, window_bounds = array<i64: 3, 32, 16>}, {pipeline_mode = #tpu.pipeline_mode<synchronous>, transform_indices = @transform_2, window_bounds = array<i64: 1, 16>}, {transform_indices = @transform_3, window_bounds = array<i64: 2, 16>}]} {
    %c0 = arith.constant 0 : index
    %c0_0 = arith.constant 0 : index
    %0 = vector.load %arg1[%c0, %c0_0] : memref<16x32xf32, #tpu.memory_space<vmem>>, vector<16x32xf32>
    %c0_1 = arith.constant 0 : index
    %c0_2 = arith.constant 0 : index
    %c0_3 = arith.constant 0 : index
    %1 = vector.load %arg2[%c0_1, %c0_2, %c0_3] : memref<3x32x16xf32, #tpu.memory_space<vmem>>, vector<1x32x16xf32>
    %2 = vector.shape_cast %1 : vector<1x32x16xf32> to vector<32x16xf32>
    %cst = arith.constant dense<0.000000e+00> : vector<16x16xf32>
    %3 = tpu.matmul %0, %2, %cst {dimension_numbers = #tpu.dot_dimension_numbers<[1], [0], [0], [1], [0, 0, 1, 1], [], []>} : vector<16x32xf32>, vector<32x16xf32>, vector<16x16xf32> -> vector<16x16xf32>
    %c1 = arith.constant 1 : index
    %c0_4 = arith.constant 0 : index
    %c0_5 = arith.constant 0 : index
    %4 = vector.load %arg2[%c1, %c0_4, %c0_5] : memref<3x32x16xf32, #tpu.memory_space<vmem>>, vector<1x32x16xf32>
    %5 = vector.shape_cast %4 : vector<1x32x16xf32> to vector<32x16xf32>
    %cst_6 = arith.constant dense<0.000000e+00> : vector<16x16xf32>
    %6 = tpu.matmul %0, %5, %cst_6 {dimension_numbers = #tpu.dot_dimension_numbers<[1], [0], [0], [1], [0, 0, 1, 1], [], []>} : vector<16x32xf32>, vector<32x16xf32>, vector<16x16xf32> -> vector<16x16xf32>
    %c2 = arith.constant 2 : index
    %c0_7 = arith.constant 0 : index
    %c0_8 = arith.constant 0 : index
    %7 = vector.load %arg2[%c2, %c0_7, %c0_8] : memref<3x32x16xf32, #tpu.memory_space<vmem>>, vector<1x32x16xf32>
    %8 = vector.shape_cast %7 : vector<1x32x16xf32> to vector<32x16xf32>
    %cst_9 = arith.constant dense<0.000000e+00> : vector<16x16xf32>
    %9 = tpu.matmul %0, %8, %cst_9 {dimension_numbers = #tpu.dot_dimension_numbers<[1], [0], [0], [1], [0, 0, 1, 1], [], []>} : vector<16x32xf32>, vector<32x16xf32>, vector<16x16xf32> -> vector<16x16xf32>
    %10 = tpu.iota {dimensions = array<i32: 0>} : vector<16x16xi32>
    %c8_i32 = arith.constant 8 : i32
    %c0_i32 = arith.constant 0 : i32
    %11 = arith.cmpi eq, %c8_i32, %c0_i32 : i32
    %c1_i32 = arith.constant 1 : i32
    %12 = arith.select %11, %c1_i32, %c8_i32 : i32
    %13 = vector.broadcast %12 : i32 to vector<16x16xi32>
    %14 = arith.remsi %10, %13 : vector<16x16xi32>
    %c0_i32_10 = arith.constant 0 : i32
    %15 = vector.broadcast %c0_i32_10 : i32 to vector<16x16xi32>
    %16 = arith.cmpi ne, %14, %15 : vector<16x16xi32>
    %c0_i32_11 = arith.constant 0 : i32
    %17 = vector.broadcast %c0_i32_11 : i32 to vector<16x16xi32>
    %18 = arith.cmpi slt, %14, %17 : vector<16x16xi32>
    %c0_i32_12 = arith.constant 0 : i32
    %19 = arith.cmpi slt, %12, %c0_i32_12 : i32
    %20 = vector.broadcast %19 : i1 to vector<16x16xi1>
    %21 = vector.broadcast %20 : vector<16x16xi1> to vector<16x16xi1>
    %22 = arith.xori %18, %21 : vector<16x16xi1>
    %23 = arith.andi %22, %16 : vector<16x16xi1>
    %24 = vector.broadcast %12 : i32 to vector<16x16xi32>
    %25 = arith.addi %14, %24 : vector<16x16xi32>
    %26 = arith.select %23, %25, %14 : vector<16x16xi1>, vector<16x16xi32>
    %c0_i32_13 = arith.constant 0 : i32
    %27 = vector.broadcast %c0_i32_13 : i32 to vector<16x16xi32>
    %28 = arith.cmpi ne, %26, %27 : vector<16x16xi32>
    %c1_i32_14 = arith.constant 1 : i32
    %29 = tpu.dynamic_rotate %3 by %c1_i32_14 dim 0 : vector<16x16xf32>, i32 -> vector<16x16xf32>
    %cst_15 = arith.constant 0.000000e+00 : f32
    %30 = vector.broadcast %cst_15 : f32 to vector<16x16xf32>
    %31 = arith.select %28, %29, %30 : vector<16x16xi1>, vector<16x16xf32>
    %c7_i32 = arith.constant 7 : i32
    %32 = vector.broadcast %c7_i32 : i32 to vector<16x16xi32>
    %33 = arith.cmpi ne, %26, %32 : vector<16x16xi32>
    %c15_i32 = arith.constant 15 : i32
    %34 = tpu.dynamic_rotate %9 by %c15_i32 dim 0 : vector<16x16xf32>, i32 -> vector<16x16xf32>
    %cst_16 = arith.constant 0.000000e+00 : f32
    %35 = vector.broadcast %cst_16 : f32 to vector<16x16xf32>
    %36 = arith.select %33, %34, %35 : vector<16x16xi1>, vector<16x16xf32>
    %37 = arith.addf %31, %6 : vector<16x16xf32>
    %38 = arith.addf %37, %36 : vector<16x16xf32>
    %39 = vector.shape_cast %38 : vector<16x16xf32> to vector<2x8x16xf32>
    %cst_17 = arith.constant dense<0xFF800000> : vector<2x16xf32>
    %40 = vector.multi_reduction <maximumf>, %39, %cst_17 [1] : vector<2x8x16xf32> to vector<2x16xf32>
    %c0_18 = arith.constant 0 : index
    %c0_19 = arith.constant 0 : index
    %41 = vector.load %arg3[%c0_18, %c0_19] : memref<1x16xf32, #tpu.memory_space<vmem>>, vector<1x16xf32>
    %42 = vector.broadcast %41 : vector<1x16xf32> to vector<2x16xf32>
    %43 = arith.addf %40, %42 : vector<2x16xf32>
    %cst_20 = arith.constant 0.000000e+00 : f32
    %44 = vector.broadcast %cst_20 : f32 to vector<2x16xf32>
    %45 = arith.maximumf %43, %44 : vector<2x16xf32>
    %c0_21 = arith.constant 0 : index
    %c0_22 = arith.constant 0 : index
    %46 = vector.load %arg4[%c0_21, %c0_22] : memref<2x16xf32, #tpu.memory_space<vmem>>, vector<2x16xf32>
    tpu.vector_store %arg4[%c0_21, %c0_22], %45 {strides = array<i32>} : memref<2x16xf32, #tpu.memory_space<vmem>>, vector<2x16xf32>,
    return
  }
  func.func @transform_0(%arg0: i32) -> (i32, i32) {
    %c0_i32 = arith.constant 0 : i32
    %c0_i32_0 = arith.constant 0 : i32
    return %arg0, %c0_i32 : i32, i32
  }
  func.func @transform_1(%arg0: i32) -> (i32, i32, i32) {
    %c0_i32 = arith.constant 0 : i32
    %c0_i32_0 = arith.constant 0 : i32
    %c0_i32_1 = arith.constant 0 : i32
    %c0_i32_2 = arith.constant 0 : i32
    return %c0_i32, %c0_i32_0, %c0_i32_1 : i32, i32, i32
  }
  func.func @transform_2(%arg0: i32) -> (i32, i32) {
    %c0_i32 = arith.constant 0 : i32
    %c0_i32_0 = arith.constant 0 : i32
    %c0_i32_1 = arith.constant 0 : i32
    return %c0_i32, %c0_i32_0 : i32, i32
  }
  func.func @transform_3(%arg0: i32) -> (i32, i32) {
    %c0_i32 = arith.constant 0 : i32
    %c0_i32_0 = arith.constant 0 : i32
    return %arg0, %c0_i32 : i32, i32
  }
}

</mosaic_0001>

<llo_original>
// kernel: tpu_custom_call.1
$region0: #{tpu_custom_call.1}
  #allocation0 [shape = 'u32[]', space=smem, size = 0x4, offset = 0x4, fixed_abs, tag = 'smem constant byte address 0x4 - core index']
  #allocation1 [shape = 'u32[144,128]{1,0:T(1,128)}', space=vmem, size = 0x12000, scoped, tag = 'internal scratch']
  %s0 = inlined_call_operand.vmem [shape: f32[16,32], index: 0, kind: input, shape index: {}]
  %s1 = inlined_call_operand.vmem [shape: f32[3,32,16], index: 1, kind: input, shape index: {}]
  %s2 = inlined_call_operand.vmem [shape: f32[1,16], index: 2, kind: input, shape index: {}]
  %s3 = inlined_call_operand.hbm [shape: f32[2,16], index: 3, kind: output, shape index: {}]
  %s4 = sld [smem:[#allocation0]]
  $region22: #{tpu_custom_call.1} parent=0
    _
  %s6 = ssub.s32 1, %s4
  %s7 = scalar_select 0, %s6, %s4
  $region1: #{tpu_custom_call.1} parent=0
    #allocation2 [shape = 'u8[1024]{0}', space=vmem, size = 0x400, scoped, tag = 'output window, operand 0, single buffered']
    #allocation3 [shape = 's32[1]{0}', space=sflag, size = 0x4, scoped, tag = 'scoped memory for tpu_custom_call.1']
    %8 = vsyncpa [#allocation3], 0
    // Predicated region
    $region2: #{tpu_custom_call.1} parent=1 // pred_check
      _
    $region3: #{tpu_custom_call.1} parent=1 // pred_check_branch
      %10 = sbr.rel (0) target = $region5
    $region4: #{tpu_custom_call.1} parent=1 // pred_region
      _
    $region5: #{tpu_custom_call.1} parent=1 // pred_fallthru
      _
    // Predicated region
    $region6: #{tpu_custom_call.1} parent=1 // pred_check
      _
    $region7: #{tpu_custom_call.1} parent=1 // pred_check_branch
      %12 = sbr.rel (0) target = $region9
    $region8: #{tpu_custom_call.1} parent=1 // pred_region
      _
    $region9: #{tpu_custom_call.1} parent=1 // pred_fallthru
      _
    // Predicated region
    $region10: #{tpu_custom_call.1} parent=1 // pred_check
      _
    $region11: #{tpu_custom_call.1} parent=1 // pred_check_branch
      %14 = sbr.rel (0) target = $region13
    $region12: #{tpu_custom_call.1} parent=1 // pred_region
      _
    $region13: #{tpu_custom_call.1} parent=1 // pred_fallthru
      _
    %v15 = vld [vmem:[%s0] sm:$0xff]
    %v16 = vld [vmem:[%s0 + $0x8] sm:$0xff]
    %v17 = vld [vmem:[%s1] sm:$0xff]
    %v18 = vld [vmem:[%s1 + $0x8] sm:$0xff]
    %v19 = vld [vmem:[%s1 + $0x10] sm:$0xff]
    %v20 = vld [vmem:[%s1 + $0x18] sm:$0xff]
    %vm21 = vcmask 261120
    %v23 = vsel %vm21, %v15, 0
    %v26 = vsel %vm21, %v16, 0
    %28 = vmatprep.subr.mxu0 0.0
    %29 = vmatpush1.msra.mxu0 %v17
    %30 = vmatprep.subr.mxu0 0.0
    %31 = vmatpush1.msra.mxu0 %v18
    %32 = vmatprep.subr.mxu0 0.0
    %33 = vmatpush1.msra.mxu0 %v19
    %34 = vmatprep.subr.mxu0 0.0
    %35 = vmatpush1.msra.mxu0 %v20
    %36 = vmatprep.subr.mxu0 0.0
    %37 = vmatpush1.msra.mxu0 0.0
    %38 = vmatprep.subr.mxu0 0.0
    %39 = vmatpush1.msra.mxu0 0.0
    %40 = vmatprep.subr.mxu0 0.0
    %41 = vmatpush1.msra.mxu0 0.0
    %42 = vmatprep.subr.mxu0 0.0
    %43 = vmatpush1.msra.mxu0 0.0
    %44 = vmatprep.subr.mxu0 0.0
    %45 = vmatpush1.msra.mxu0 0.0
    %46 = vmatprep.subr.mxu0 0.0
    %47 = vmatpush1.msra.mxu0 0.0
    %48 = vmatprep.subr.mxu0 0.0
    %49 = vmatpush1.msra.mxu0 0.0
    %50 = vmatprep.subr.mxu0 0.0
    %51 = vmatpush1.msra.mxu0 0.0
    %52 = vmatprep.subr.mxu0 0.0
    %53 = vmatpush1.msra.mxu0 0.0
    %54 = vmatprep.subr.mxu0 0.0
    %55 = vmatpush1.msra.mxu0 0.0
    %56 = vmatprep.subr.mxu0 0.0
    %57 = vmatpush1.msra.mxu0 0.0
    %58 = vmatprep.subr.mxu0 0.0
    %59 = vmatpush1.msra.mxu0 0.0
    %60 = vmatprep.subr.mxu0 0.0
    %61 = vmatpush1.msra.mxu0 0.0
    %62 = vmatprep.subr.mxu0 0.0
    %63 = vmatpush1.msra.mxu0 0.0
    %64 = vmatprep.subr.mxu0 0.0
    %65 = vmatpush1.msra.mxu0 0.0
    %66 = vmatprep.subr.mxu0 0.0
    %67 = vmatpush1.msra.mxu0 0.0
    %68 = vmatprep.subr.mxu0 0.0
    %69 = vmatpush1.msra.mxu0 0.0
    %70 = vmatprep.subr.mxu0 0.0
    %71 = vmatpush1.msra.mxu0 0.0
    %72 = vmatprep.subr.mxu0 0.0
    %73 = vmatpush1.msra.mxu0 0.0
    %74 = vmatprep.subr.mxu0 0.0
    %75 = vmatpush1.msra.mxu0 0.0
    %76 = vmatprep.subr.mxu0 0.0
    %77 = vmatpush1.msra.mxu0 0.0
    %78 = vmatprep.subr.mxu0 0.0
    %79 = vmatpush1.msra.mxu0 0.0
    %80 = vmatprep.subr.mxu0 0.0
    %81 = vmatpush1.msra.mxu0 0.0
    %82 = vmatprep.subr.mxu0 0.0
    %83 = vmatpush1.msra.mxu0 0.0
    %84 = vmatprep.subr.mxu0 0.0
    %85 = vmatpush1.msra.mxu0 0.0
    %86 = vmatprep.subr.mxu0 0.0
    %87 = vmatpush1.msra.mxu0 0.0
    %88 = vmatprep.subr.mxu0 0.0
    %89 = vmatpush1.msra.mxu0 0.0
    %90 = vmatprep.subr.mxu0 0.0
    %91 = vmatpush1.msra.mxu0 0.0
    %92 = vmatprep.mubr.f32.mxu0 0.0
    %93 = vmatmul.mubr.f32.gmra.mrb[0].mxu0 %v23
    %v94 = vpop.f32.mrb[0].mxu0
    %v95 = vadd.f32 0.0, %v94
    %v96 = vpop.f32.mrb[0].mxu0
    %97 = vmatprep.mubr.f32.mxu0 0.0
    %98 = vmatmul.mubr.f32.gmra.mrb[0].mxu0 %v26
    %v99 = vpop.f32.mrb[0].mxu0
    %v100 = vadd.f32 0.0, %v99
    %v101 = vpop.f32.mrb[0].mxu0
    %102 = vdwg.mxu0
    %s103 = scalar_lea.vmem %s1, 32
    %v104 = vld [vmem:[%s103] sm:$0xff]
    %v105 = vld [vmem:[%s103 + $0x8] sm:$0xff]
    %v106 = vld [vmem:[%s103 + $0x10] sm:$0xff]
    %v107 = vld [vmem:[%s103 + $0x18] sm:$0xff]
    %108 = vmatprep.subr.mxu0 0.0
    %109 = vmatpush1.msra.mxu0 %v104
    %110 = vmatprep.subr.mxu0 0.0
    %111 = vmatpush1.msra.mxu0 %v105
    %112 = vmatprep.subr.mxu0 0.0
    %113 = vmatpush1.msra.mxu0 %v106
    %114 = vmatprep.subr.mxu0 0.0
    %115 = vmatpush1.msra.mxu0 %v107
    %116 = vmatprep.subr.mxu0 0.0
    %117 = vmatpush1.msra.mxu0 0.0
    %118 = vmatprep.subr.mxu0 0.0
    %119 = vmatpush1.msra.mxu0 0.0
    %120 = vmatprep.subr.mxu0 0.0
    %121 = vmatpush1.msra.mxu0 0.0
    %122 = vmatprep.subr.mxu0 0.0
    %123 = vmatpush1.msra.mxu0 0.0
    %124 = vmatprep.subr.mxu0 0.0
    %125 = vmatpush1.msra.mxu0 0.0
    %126 = vmatprep.subr.mxu0 0.0
    %127 = vmatpush1.msra.mxu0 0.0
    %128 = vmatprep.subr.mxu0 0.0
    %129 = vmatpush1.msra.mxu0 0.0
    %130 = vmatprep.subr.mxu0 0.0
    %131 = vmatpush1.msra.mxu0 0.0
    %132 = vmatprep.subr.mxu0 0.0
    %133 = vmatpush1.msra.mxu0 0.0
    %134 = vmatprep.subr.mxu0 0.0
    %135 = vmatpush1.msra.mxu0 0.0
    %136 = vmatprep.subr.mxu0 0.0
    %137 = vmatpush1.msra.mxu0 0.0
    %138 = vmatprep.subr.mxu0 0.0
    %139 = vmatpush1.msra.mxu0 0.0
    %140 = vmatprep.subr.mxu0 0.0
    %141 = vmatpush1.msra.mxu0 0.0
    %142 = vmatprep.subr.mxu0 0.0
    %143 = vmatpush1.msra.mxu0 0.0
    %144 = vmatprep.subr.mxu0 0.0
    %145 = vmatpush1.msra.mxu0 0.0
    %146 = vmatprep.subr.mxu0 0.0
    %147 = vmatpush1.msra.mxu0 0.0
    %148 = vmatprep.subr.mxu0 0.0
    %149 = vmatpush1.msra.mxu0 0.0
    %150 = vmatprep.subr.mxu0 0.0
    %151 = vmatpush1.msra.mxu0 0.0
    %152 = vmatprep.subr.mxu0 0.0
    %153 = vmatpush1.msra.mxu0 0.0
    %154 = vmatprep.subr.mxu0 0.0
    %155 = vmatpush1.msra.mxu0 0.0
    %156 = vmatprep.subr.mxu0 0.0
    %157 = vmatpush1.msra.mxu0 0.0
    %158 = vmatprep.subr.mxu0 0.0
    %159 = vmatpush1.msra.mxu0 0.0
    %160 = vmatprep.subr.mxu0 0.0
    %161 = vmatpush1.msra.mxu0 0.0
    %162 = vmatprep.subr.mxu0 0.0
    %163 = vmatpush1.msra.mxu0 0.0
    %164 = vmatprep.subr.mxu0 0.0
    %165 = vmatpush1.msra.mxu0 0.0
    %166 = vmatprep.subr.mxu0 0.0
    %167 = vmatpush1.msra.mxu0 0.0
    %168 = vmatprep.subr.mxu0 0.0
    %169 = vmatpush1.msra.mxu0 0.0
    %170 = vmatprep.subr.mxu0 0.0
    %171 = vmatpush1.msra.mxu0 0.0
    %172 = vmatprep.mubr.f32.mxu0 0.0
    %173 = vmatmul.mubr.f32.gmra.mrb[0].mxu0 %v23
    %v174 = vpop.f32.mrb[0].mxu0
    %v175 = vadd.f32 0.0, %v174
    %v176 = vpop.f32.mrb[0].mxu0
    %177 = vmatprep.mubr.f32.mxu0 0.0
    %178 = vmatmul.mubr.f32.gmra.mrb[0].mxu0 %v26
    %v179 = vpop.f32.mrb[0].mxu0
    %v180 = vadd.f32 0.0, %v179
    %v181 = vpop.f32.mrb[0].mxu0
    %182 = vdwg.mxu0
    %s183 = scalar_lea.vmem %s1, 64
    %v184 = vld [vmem:[%s183] sm:$0xff]
    %v185 = vld [vmem:[%s183 + $0x8] sm:$0xff]
    %v186 = vld [vmem:[%s183 + $0x10] sm:$0xff]
    %v187 = vld [vmem:[%s183 + $0x18] sm:$0xff]
    %188 = vmatprep.subr.mxu0 0.0
    %189 = vmatpush1.msra.mxu0 %v184
    %190 = vmatprep.subr.mxu0 0.0
    %191 = vmatpush1.msra.mxu0 %v185
    %192 = vmatprep.subr.mxu0 0.0
    %193 = vmatpush1.msra.mxu0 %v186
    %194 = vmatprep.subr.mxu0 0.0
    %195 = vmatpush1.msra.mxu0 %v187
    %196 = vmatprep.subr.mxu0 0.0
    %197 = vmatpush1.msra.mxu0 0.0
    %198 = vmatprep.subr.mxu0 0.0
    %199 = vmatpush1.msra.mxu0 0.0
    %200 = vmatprep.subr.mxu0 0.0
    %201 = vmatpush1.msra.mxu0 0.0
    %202 = vmatprep.subr.mxu0 0.0
    %203 = vmatpush1.msra.mxu0 0.0
    %204 = vmatprep.subr.mxu0 0.0
    %205 = vmatpush1.msra.mxu0 0.0
    %206 = vmatprep.subr.mxu0 0.0
    %207 = vmatpush1.msra.mxu0 0.0
    %208 = vmatprep.subr.mxu0 0.0
    %209 = vmatpush1.msra.mxu0 0.0
    %210 = vmatprep.subr.mxu0 0.0
    %211 = vmatpush1.msra.mxu0 0.0
    %212 = vmatprep.subr.mxu0 0.0
    %213 = vmatpush1.msra.mxu0 0.0
    %214 = vmatprep.subr.mxu0 0.0
    %215 = vmatpush1.msra.mxu0 0.0
    %216 = vmatprep.subr.mxu0 0.0
    %217 = vmatpush1.msra.mxu0 0.0
    %218 = vmatprep.subr.mxu0 0.0
    %219 = vmatpush1.msra.mxu0 0.0
    %220 = vmatprep.subr.mxu0 0.0
    %221 = vmatpush1.msra.mxu0 0.0
    %222 = vmatprep.subr.mxu0 0.0
    %223 = vmatpush1.msra.mxu0 0.0
    %224 = vmatprep.subr.mxu0 0.0
    %225 = vmatpush1.msra.mxu0 0.0
    %226 = vmatprep.subr.mxu0 0.0
    %227 = vmatpush1.msra.mxu0 0.0
    %228 = vmatprep.subr.mxu0 0.0
    %229 = vmatpush1.msra.mxu0 0.0
    %230 = vmatprep.subr.mxu0 0.0
    %231 = vmatpush1.msra.mxu0 0.0
    %232 = vmatprep.subr.mxu0 0.0
    %233 = vmatpush1.msra.mxu0 0.0
    %234 = vmatprep.subr.mxu0 0.0
    %235 = vmatpush1.msra.mxu0 0.0
    %236 = vmatprep.subr.mxu0 0.0
    %237 = vmatpush1.msra.mxu0 0.0
    %238 = vmatprep.subr.mxu0 0.0
    %239 = vmatpush1.msra.mxu0 0.0
    %240 = vmatprep.subr.mxu0 0.0
    %241 = vmatpush1.msra.mxu0 0.0
    %242 = vmatprep.subr.mxu0 0.0
    %243 = vmatpush1.msra.mxu0 0.0
    %244 = vmatprep.subr.mxu0 0.0
    %245 = vmatpush1.msra.mxu0 0.0
    %246 = vmatprep.subr.mxu0 0.0
    %247 = vmatpush1.msra.mxu0 0.0
    %248 = vmatprep.subr.mxu0 0.0
    %249 = vmatpush1.msra.mxu0 0.0
    %250 = vmatprep.subr.mxu0 0.0
    %251 = vmatpush1.msra.mxu0 0.0
    %252 = vmatprep.mubr.f32.mxu0 0.0
    %253 = vmatmul.mubr.f32.gmra.mrb[0].mxu0 %v23
    %v254 = vpop.f32.mrb[0].mxu0
    %v255 = vadd.f32 0.0, %v254
    %v256 = vpop.f32.mrb[0].mxu0
    %257 = vmatprep.mubr.f32.mxu0 0.0
    %258 = vmatmul.mubr.f32.gmra.mrb[0].mxu0 %v26
    %v259 = vpop.f32.mrb[0].mxu0
    %v260 = vadd.f32 0.0, %v259
    %v261 = vpop.f32.mrb[0].mxu0
    %262 = vdwg.mxu0
    %v263 = vlaneseq
    %v264 = vshrl.u32 %v263, 7
    %v265 = vadd.s32 %v264, 8
    %vm266 = vcmp.lt.s32.totalorder %v264, 0
    %v267 = vsub.s32 0, %v264
    %v268 = vsel %vm266, %v267, %v264
    %v269 = vshrl.u32 %v268, 3
    %v270 = vand.u32 %v268, 7
    %v271 = vsub.s32 0, %v270
    %v272 = vsel %vm266, %v271, %v270
    %vm273 = vcmp.lt.s32.totalorder %v265, 0
    %v274 = vsub.s32 0, %v265
    %v275 = vsel %vm273, %v274, %v265
    %v276 = vshrl.u32 %v275, 3
    %v277 = vand.u32 %v275, 7
    %v278 = vsub.s32 0, %v277
    %v279 = vsel %vm273, %v278, %v277
    %vm280 = vcmp.ne.s32.totalorder %v272, 0
    %vm281 = vcmp.ne.s32.totalorder %v279, 0
    %vm282 = vcmp.lt.s32.totalorder %v272, 0
    %vm283 = vcmp.lt.s32.totalorder %v279, 0
    %vm284 = vmand %vm282, %vm280
    %vm285 = vmand %vm283, %vm281
    %v286 = vadd.s32 %v272, 8
    %v287 = vadd.s32 %v279, 8
    %v288 = vsel %vm284, %v286, %v272
    %v289 = vsel %vm285, %v287, %v279
    %vm290 = vcmp.ne.s32.totalorder %v288, 0
    %vm291 = vcmp.ne.s32.totalorder %v289, 0
    %v292 = vrot.slane %v95, 7
    %v293 = vrot.slane %v100, 7
    %vm294 = vcmp.lt.s32.totalorder %v264, 1
    %v295 = vsel %vm294, %v292, %v293
    %v296 = vsel %vm294, %v293, %v292
    %v297 = vsel %vm290, %v296, 0.0
    %v298 = vsel %vm291, %v295, 0.0
    %vm299 = vcmp.ne.s32.totalorder %v288, 7
    %vm300 = vcmp.ne.s32.totalorder %v289, 7
    %v301 = vrot.slane %v255, 1
    %v302 = vrot.slane %v260, 1
    %vm303 = vcmp.lt.s32.totalorder %v264, 7
    %v304 = vsel %vm303, %v301, %v302
    %v305 = vsel %vm303, %v302, %v301
    %v306 = vsel %vm299, %v304, 0.0
    %v307 = vsel %vm300, %v305, 0.0
    %v308 = vadd.f32 %v297, %v175
    %v309 = vadd.f32 %v298, %v180
    %v310 = vadd.f32 %v308, %v306
    %v311 = vadd.f32 %v309, %v307
    %vm312 = vcmask 130048
    %v313 = vsel %vm312, %v310, -inf
    %v314 = vrot.slane %v313, 4
    %v315 = vmax.f32 %v313, %v314
    %v316 = vrot.slane %v315, 2
    %v317 = vmax.f32 %v315, %v316
    %v318 = vrot.slane %v317, 1
    %v319 = vmax.f32 %v317, %v318
    %v320 = vsel %vm312, %v311, -inf
    %v321 = vrot.slane %v320, 4
    %v322 = vmax.f32 %v320, %v321
    %v323 = vrot.slane %v322, 2
    %v324 = vmax.f32 %v322, %v323
    %v325 = vrot.slane %v324, 1
    %v326 = vmax.f32 %v324, %v325
    %v327 = vld [vmem:[%s2] sm:$0x1]
    %v329 = vlaneseq
    %v330 = vshrl.u32 %v329, 7
    %v331 = vsub.s32 0, %v330
    %v332 = vrot.slane %v327, %v331
    %v334 = vadd.f32 %v319, %v332
    %v335 = vadd.f32 %v326, %v332
    %v336 = vmax.f32 %v334, 0.0
    %v337 = vmax.f32 %v335, 0.0
    %v340 = vrot.slane %v337, 7
    %vm341 = vcmask 1041409
    %v342 = vsel %vm341, %v340, %v336
    %vm344 = vcmask 123904
    %345 = vst.msk [vmem:[#allocation2] sm:$0x3] %vm344, %v342
    // Predicated region
    $region14: #{tpu_custom_call.1} parent=1 // pred_check
      _
    $region15: #{tpu_custom_call.1} parent=1 // pred_check_branch
      %347 = sbr.rel (0) target = $region17
    $region16: #{tpu_custom_call.1} parent=1 // pred_region
      %s349 = ssub.s32 32, 32
      %350 = vsyncadd [#allocation3], %s349
      %s352 = sshll.u32 [#allocation2], 4
      %s353 = int_to_ptr.vmem [resolvable:$true] %s352
      %355 = dma.vmem_to_hbm [thread:$0]  %s353, 32, %s3, [#allocation3]
    $region17: #{tpu_custom_call.1} parent=1 // pred_fallthru
      _
    // Predicated region
    $region18: #{tpu_custom_call.1} parent=1 // pred_check
      _
    $region19: #{tpu_custom_call.1} parent=1 // pred_check_branch
      %357 = sbr.rel (0) target = $region21
    $region20: #{tpu_custom_call.1} parent=1 // pred_region
      %358 = dma.done [#allocation3], 32
    $region21: #{tpu_custom_call.1} parent=1 // pred_fallthru
      _
    %359 = vsyncpa [#allocation3], 1

</llo_original>
